<compile_context>
chip_gen: v6e
topology: v6e:2x2x1
jax: 0.10.0
libtpu: 0.0.40
codegen_flags: <defaults>
</compile_context>

<pallas_src>
import functools

import jax
import jax.numpy as jnp
from jax.experimental import pallas as pl
from jax.experimental.pallas import tpu as pltpu


def _cheby_conv_kernel(L_ref, x_ref, w_ref, b_ref, y_ref, tbuf_ref, *,
                       k, tm, l_resident):
    """One grid step = (order step i, row tile m).

    Order step i (k >= 1) produces T_{i+1} for row tile m:
        T_1     = L @ T_0                      (T_0 == x, read from x_ref)
        T_{i+1} = 2 * L @ T_i - T_{i-1}        (i >= 1)
    T_1..T_k live in the resident f32 VMEM scratch `tbuf_ref`.  At the last
    order the projection y = sum_o T_o @ W_o + b is emitted for this row tile
    (static unroll over orders; no concatenate, no dynamic lane-dim slicing).
    """
    i = pl.program_id(0)                     # order step (produces T_{i+1})
    m = pl.program_id(1)                     # row tile
    n_ord = pl.num_programs(0)
    row_m = pl.multiple_of(m * tm, tm)
    cdt = w_ref.dtype                        # MXU operand dtype (bf16 / f32)

    if k >= 1:
        l_slab = L_ref[pl.ds(row_m, tm), :] if l_resident else L_ref[...]

        # Contraction RHS: T_i over ALL rows (T_0 == x lives in x_ref, f32).
        rhs = jnp.where(i == 0, x_ref[...], tbuf_ref[jnp.maximum(i, 1) - 1])
        acc = jnp.dot(l_slab, rhs.astype(cdt),
                      preferred_element_type=jnp.float32)

        # Chebyshev recursion (f32): subtrahend T_{i-1} for this row tile.
        prev = jnp.where(i <= 1,
                         x_ref[pl.ds(row_m, tm), :],
                         tbuf_ref[jnp.maximum(i, 2) - 2, pl.ds(row_m, tm), :])
        t_new = jnp.where(i == 0, acc, 2.0 * acc - prev)
        tbuf_ref[i, pl.ds(row_m, tm), :] = t_new

    # Projection only at the last order.  The out index_map collapses to block
    # 0 for earlier orders, so no garbage tile is ever written back to HBM.
    @pl.when(i == n_ord - 1)
    def _():
        x_rows = x_ref[pl.ds(row_m, tm), :]
        y = jnp.dot(x_rows.astype(cdt), w_ref[0],
                    preferred_element_type=jnp.float32) + b_ref[...]
        for o in range(1, k + 1):            # static unroll, static W slices
            y += jnp.dot(tbuf_ref[o - 1, pl.ds(row_m, tm), :].astype(cdt),
                         w_ref[o], preferred_element_type=jnp.float32)
        y_ref[...] = y.astype(y_ref.dtype)


def _round_up(a, b):
    return (a + b - 1) // b * b


def _vmem_capacity_bytes():
    # Generation-aware budget (v5e/v6e: 128 MiB, v7x: 64 MiB); fall back to
    # the most conservative figure if the query is unavailable.
    try:
        return int(pltpu.get_tpu_info().vmem_capacity_bytes)
    except Exception:
        return 64 << 20


def cheby_conv(scaled_laplacian, x, weight, bias, *, k, tm=None,
               compute_dtype=jnp.bfloat16, l_resident=None, interpret=False):
    """Pallas TPU forward of ChebyConv: y = concat(T_0..T_k, dim=1) @ W.T + b."""
    N, d1 = x.shape
    d2, fan_in = weight.shape
    assert fan_in == d1 * (k + 1), (weight.shape, d1, k)
    assert scaled_laplacian.shape == (N, N), scaled_laplacian.shape

    out_dtype = x.dtype
    cdt = jnp.dtype(compute_dtype)
    csz = cdt.itemsize
    osz = jnp.dtype(out_dtype).itemsize
    d2p = max(128, _round_up(d2, 128))            # lane-dense output stores
    d1l = _round_up(d1, 128)                      # lane-padded d1 (VMEM layout)
    n_t = max(k, 1)

    # ---- row tiling (N is zero-padded so the tile always divides) ----------
    if tm is None:
        if N <= 1024:
            tm = _round_up(N, 8)
        else:   # minimise padding, prefer the largest tile
            tm = -min((_round_up(N, c) - N, -c) for c in (1024, 512, 256, 128))[1]
    tm = min(max(_round_up(tm, 8), 8), _round_up(N, 8))

    cap = max(_vmem_capacity_bytes() - (16 << 20), 16 << 20)   # headroom

    def vmem_estimate(tm_, resident_):
        np_ = _round_up(N, tm_)
        fixed = (2 * np_ * d1l * 4                  # x (f32, resident)
                 + 2 * (k + 1) * d1 * d2p * csz     # reshaped W.T (resident)
                 + 2 * 8 * d2p * 4                  # bias
                 + 2 * tm_ * d2p * osz              # y tile (double-buffered)
                 + n_t * np_ * d1l * 4              # T_1..T_k scratch (f32)
                 + tm_ * np_ * csz                  # L-slab operand temp
                 + np_ * d1l * (4 + csz)            # RHS select + cast temps
                 + tm_ * (d2p + d1l) * 4)           # epilogue / t_new temps
        l_bytes = 2 * (np_ * np_ if resident_ else tm_ * np_) * csz
        return fixed + l_bytes

    # ---- L residency: DMA L once & reuse across all K orders when it fits --
    if l_resident is None:
        l_resident = vmem_estimate(tm, True) <= cap
    if not l_resident:
        while tm > 8 and vmem_estimate(tm, False) > cap:
            tm = max(8, _round_up(tm // 2, 8))
        # TODO(synk): for N so large that even an (8, N) slab of L overflows
        # VMEM, a contraction grid axis would be needed again.
    n_pad = _round_up(N, tm)
    est = vmem_estimate(tm, l_resident)
    vmem_limit = int(min(cap, max(est * 5 // 4 + (2 << 20), 16 << 20)))

    # ---- operand preparation (zero-padding is exact: padded rows stay 0) ---
    Lc = scaled_laplacian.astype(cdt)
    xc = x.astype(jnp.float32)
    if n_pad != N:
        Lc = jnp.zeros((n_pad, n_pad), cdt).at[:N, :N].set(Lc)
        xc = jnp.zeros((n_pad, d1), jnp.float32).at[:N, :].set(xc)
    wt = jnp.zeros((k + 1, d1, d2p), cdt).at[:, :, :d2].set(
        weight.T.reshape(k + 1, d1, d2).astype(cdt))
    bz = jnp.zeros((1, d2p), jnp.float32).at[:, :d2].set(
        bias.reshape(1, d2).astype(jnp.float32))

    n_ord = max(k, 1)
    grid = (n_ord, n_pad // tm)

    if l_resident:
        l_spec = pl.BlockSpec((n_pad, n_pad), lambda i, m: (0, 0))   # DMA once
    else:
        # TODO(synk): pipeline_mode=pl.Buffered(3) here if profiling shows
        # exposed L DMA behind the heavier last-order steps.
        l_spec = pl.BlockSpec((tm, n_pad), lambda i, m: (m, 0))

    # Output tile only becomes valid at the last order; collapse its block
    # index before that so no uninitialised VMEM is ever written back to HBM.
    out_spec = pl.BlockSpec(
        (tm, d2p), lambda i, m: (jnp.where(i == n_ord - 1, m, 0), 0))

    kernel = functools.partial(_cheby_conv_kernel, k=k, tm=tm,
                               l_resident=l_resident)
    y = pl.pallas_call(
        kernel,
        out_shape=jax.ShapeDtypeStruct((n_pad, d2p), out_dtype),
        grid=grid,
        in_specs=[
            l_spec,                                                  # L
            pl.BlockSpec((n_pad, d1), lambda i, m: (0, 0)),          # x resident
            pl.BlockSpec((k + 1, d1, d2p), lambda i, m: (0, 0, 0)),  # W.T resident
            pl.BlockSpec((1, d2p), lambda i, m: (0, 0)),             # bias
        ],
        out_specs=out_spec,
        scratch_shapes=[pltpu.VMEM((n_t, n_pad, d1), jnp.float32)],  # T_1..T_k
        compiler_params=pltpu.CompilerParams(
            dimension_semantics=("arbitrary", "arbitrary"),
            vmem_limit_bytes=vmem_limit),
        interpret=interpret,
    )(Lc, xc, wt, bz)
    return y[:N, :d2]


def cheby_conv_ref(L, x, weight, bias, *, k):
    polys = [x]
    if k >= 1:
        polys.append(L @ x)
    for i in range(2, k + 1):
        polys.append(2.0 * (L @ polys[i - 1]) - polys[i - 2])
    return jnp.concatenate(polys, axis=1) @ weight.T + bias


def _check(y, y_ref, tol, name):
    scale = jnp.maximum(1.0, jnp.max(jnp.abs(y_ref)))
    err = float(jnp.max(jnp.abs(y - y_ref)) / scale)
    assert err < tol, (name, err)


if __name__ == "__main__":
    key = jax.random.PRNGKey(0)
    k_l, k_x, k_w, k_b, k_l2, k_x2 = jax.random.split(key, 6)

    K = 3
    N, D1, D2 = 64, 32, 32                 # nodes, in-features, out-features

    def make_laplacian(rng, n):
        a = jax.random.normal(rng, (n, n), dtype=jnp.float32)
        a = 0.5 * (a + a.T)
        return a / jnp.max(jnp.sum(jnp.abs(a), axis=1))   # spectral radius <= 1

    L = make_laplacian(k_l, N)
    x = jax.random.normal(k_x, (N, D1), dtype=jnp.float32)

    fan_in = D1 * (K + 1)
    bound = 1.0 / (fan_in ** 0.5)
    weight = jax.random.uniform(k_w, (D2, fan_in), jnp.float32, -bound, bound)
    bias = jax.random.uniform(k_b, (D2,), jnp.float32, -bound, bound)

    y_ref = cheby_conv_ref(L, x, weight, bias, k=K)

    # 1) f32 MXU operands, resident L, single row tile.
    y = jax.block_until_ready(
        cheby_conv(L, x, weight, bias, k=K, compute_dtype=jnp.float32))
    assert y.shape == (N, D2)
    _check(y, y_ref, 5e-3, "f32-resident")

    # 2) default bf16 MXU operands (recursion / accumulation stay f32).
    y = jax.block_until_ready(cheby_conv(L, x, weight, bias, k=K))
    _check(y, y_ref, 3e-2, "bf16-resident")

    # 3) multi row-tile + forced L-streaming path (grid = (3, 2)).
    N2 = 256
    L2 = make_laplacian(k_l2, N2)
    x2 = jax.random.normal(k_x2, (N2, D1), dtype=jnp.float32)
    y2 = jax.block_until_ready(
        cheby_conv(L2, x2, weight, bias, k=K, tm=128, l_resident=False))
    _check(y2, cheby_conv_ref(L2, x2, weight, bias, k=K), 3e-2, "bf16-streamed")

    # 4) N not a multiple of 8 (zero-padding path), smaller order k=2.
    K3, N3 = 2, 100
    w3 = weight[:, : D1 * (K3 + 1)]
    L3 = make_laplacian(k_x2, N3)
    x3 = jax.random.normal(k_b, (N3, D1), dtype=jnp.float32)
    y3 = jax.block_until_ready(cheby_conv(L3, x3, w3, bias, k=K3))
    _check(y3, cheby_conv_ref(L3, x3, w3, bias, k=K3), 3e-2, "bf16-padded")

    print("KERNEL_OK")
</pallas_src>

<mosaic_0001>
module attributes {stable_mosaic.version = 11 : i64} {
  func.func @_cheby_conv_kernel(%arg0: i32, %arg1: i32, %arg2: memref<64x64xf32, #tpu.memory_space<vmem>>, %arg3: memref<64x32xf32, #tpu.memory_space<vmem>>, %arg4: memref<4x32x128xf32, #tpu.memory_space<vmem>>, %arg5: memref<1x128xf32, #tpu.memory_space<vmem>>, %arg6: memref<64x128xf32, #tpu.memory_space<vmem>>, %arg7: memref<3x64x32xf32, #tpu.memory_space<vmem>>) attributes {dimension_semantics = [#tpu.dimension_semantics<arbitrary>, #tpu.dimension_semantics<arbitrary>], iteration_bounds = array<i64: 3, 1>, scalar_prefetch = 0 : i64, scratch_operands = 1 : i64, tpu.core_type = #tpu.core_type<tc>, window_params = [{pipeline_mode = #tpu.pipeline_mode<synchronous>, transform_indices = @transform_0, window_bounds = array<i64: 64, 64>}, {pipeline_mode = #tpu.pipeline_mode<synchronous>, transform_indices = @transform_1, window_bounds = array<i64: 64, 32>}, {pipeline_mode = #tpu.pipeline_mode<synchronous>, transform_indices = @transform_2, window_bounds = array<i64: 4, 32, 128>}, {pipeline_mode = #tpu.pipeline_mode<synchronous>, transform_indices = @transform_3, window_bounds = array<i64: 1, 128>}, {transform_indices = @transform_4, window_bounds = array<i64: 64, 128>}]} {
    %c64_i32 = arith.constant 64 : i32
    %0 = arith.muli %arg1, %c64_i32 : i32
    %1 = tpu.assume_multiple %0, 64 : i32
    %2 = arith.index_cast %1 : i32 to index
    %c0 = arith.constant 0 : index
    %3 = vector.load %arg2[%2, %c0] : memref<64x64xf32, #tpu.memory_space<vmem>>, vector<64x64xf32>
    %c0_i32 = arith.constant 0 : i32
    %4 = arith.cmpi eq, %arg0, %c0_i32 : i32
    %c0_0 = arith.constant 0 : index
    %c0_1 = arith.constant 0 : index
    %5 = vector.load %arg3[%c0_0, %c0_1] : memref<64x32xf32, #tpu.memory_space<vmem>>, vector<64x32xf32>
    %c1_i32 = arith.constant 1 : i32
    %6 = arith.maxsi %arg0, %c1_i32 : i32
    %c1_i32_2 = arith.constant 1 : i32
    %7 = arith.subi %6, %c1_i32_2 : i32
    %8 = arith.index_cast %7 : i32 to index
    %c0_3 = arith.constant 0 : index
    %c0_4 = arith.constant 0 : index
    %9 = vector.load %arg7[%8, %c0_3, %c0_4] : memref<3x64x32xf32, #tpu.memory_space<vmem>>, vector<1x64x32xf32>
    %10 = vector.shape_cast %9 : vector<1x64x32xf32> to vector<64x32xf32>
    %11 = arith.select %4, %5, %10 : vector<64x32xf32>
    %cst = arith.constant dense<0.000000e+00> : vector<64x32xf32>
    %12 = tpu.matmul %3, %11, %cst {dimension_numbers = #tpu.dot_dimension_numbers<[1], [0], [0], [1], [0, 0, 1, 1], [], []>} : vector<64x64xf32>, vector<64x32xf32>, vector<64x32xf32> -> vector<64x32xf32>
    %c1_i32_5 = arith.constant 1 : i32
    %13 = arith.cmpi sle, %arg0, %c1_i32_5 : i32
    %14 = arith.index_cast %1 : i32 to index
    %c0_6 = arith.constant 0 : index
    %15 = vector.load %arg3[%14, %c0_6] : memref<64x32xf32, #tpu.memory_space<vmem>>, vector<64x32xf32>
    %c2_i32 = arith.constant 2 : i32
    %16 = arith.maxsi %arg0, %c2_i32 : i32
    %c2_i32_7 = arith.constant 2 : i32
    %17 = arith.subi %16, %c2_i32_7 : i32
    %18 = arith.index_cast %17 : i32 to index
    %19 = arith.index_cast %1 : i32 to index
    %c0_8 = arith.constant 0 : index
    %20 = vector.load %arg7[%18, %19, %c0_8] : memref<3x64x32xf32, #tpu.memory_space<vmem>>, vector<1x64x32xf32>
    %21 = vector.shape_cast %20 : vector<1x64x32xf32> to vector<64x32xf32>
    %22 = arith.select %13, %15, %21 : vector<64x32xf32>
    %c0_i32_9 = arith.constant 0 : i32
    %23 = arith.cmpi eq, %arg0, %c0_i32_9 : i32
    %cst_10 = arith.constant 2.000000e+00 : f32
    %24 = vector.broadcast %cst_10 : f32 to vector<64x32xf32>
    %25 = arith.mulf %24, %12 : vector<64x32xf32>
    %26 = arith.subf %25, %22 : vector<64x32xf32>
    %27 = arith.select %23, %12, %26 : vector<64x32xf32>
    %28 = arith.index_cast %arg0 : i32 to index
    %29 = arith.index_cast %1 : i32 to index
    %c0_11 = arith.constant 0 : index
    %30 = vector.load %arg7[%28, %29, %c0_11] : memref<3x64x32xf32, #tpu.memory_space<vmem>>, vector<1x64x32xf32>
    %31 = vector.shape_cast %30 : vector<1x64x32xf32> to vector<64x32xf32>
    %32 = vector.shape_cast %27 : vector<64x32xf32> to vector<1x64x32xf32>
    tpu.vector_store %arg7[%28, %29, %c0_11], %32 {strides = array<i32>} : memref<3x64x32xf32, #tpu.memory_space<vmem>>, vector<1x64x32xf32>,
    %c2_i32_12 = arith.constant 2 : i32
    %33 = arith.cmpi eq, %arg0, %c2_i32_12 : i32
    %34 = arith.extui %33 : i1 to i32
    %c0_i32_13 = arith.constant 0 : i32
    %35 = arith.cmpi ne, %34, %c0_i32_13 : i32
    scf.if %35 {
      %36 = arith.index_cast %1 : i32 to index
      %c0_14 = arith.constant 0 : index
      %37 = vector.load %arg3[%36, %c0_14] : memref<64x32xf32, #tpu.memory_space<vmem>>, vector<64x32xf32>
      %c0_15 = arith.constant 0 : index
      %c0_16 = arith.constant 0 : index
      %c0_17 = arith.constant 0 : index
      %38 = vector.load %arg4[%c0_15, %c0_16, %c0_17] : memref<4x32x128xf32, #tpu.memory_space<vmem>>, vector<1x32x128xf32>
      %39 = vector.shape_cast %38 : vector<1x32x128xf32> to vector<32x128xf32>
      %cst_18 = arith.constant dense<0.000000e+00> : vector<64x128xf32>
      %40 = tpu.matmul %37, %39, %cst_18 {dimension_numbers = #tpu.dot_dimension_numbers<[1], [0], [0], [1], [0, 0, 1, 1], [], []>} : vector<64x32xf32>, vector<32x128xf32>, vector<64x128xf32> -> vector<64x128xf32>
      %c0_19 = arith.constant 0 : index
      %c0_20 = arith.constant 0 : index
      %41 = vector.load %arg5[%c0_19, %c0_20] : memref<1x128xf32, #tpu.memory_space<vmem>>, vector<1x128xf32>
      %42 = vector.broadcast %41 : vector<1x128xf32> to vector<64x128xf32>
      %43 = arith.addf %40, %42 : vector<64x128xf32>
      %c0_21 = arith.constant 0 : index
      %44 = arith.index_cast %1 : i32 to index
      %c0_22 = arith.constant 0 : index
      %45 = vector.load %arg7[%c0_21, %44, %c0_22] : memref<3x64x32xf32, #tpu.memory_space<vmem>>, vector<1x64x32xf32>
      %46 = vector.shape_cast %45 : vector<1x64x32xf32> to vector<64x32xf32>
      %c1 = arith.constant 1 : index
      %c0_23 = arith.constant 0 : index
      %c0_24 = arith.constant 0 : index
      %47 = vector.load %arg4[%c1, %c0_23, %c0_24] : memref<4x32x128xf32, #tpu.memory_space<vmem>>, vector<1x32x128xf32>
      %48 = vector.shape_cast %47 : vector<1x32x128xf32> to vector<32x128xf32>
      %cst_25 = arith.constant dense<0.000000e+00> : vector<64x128xf32>
      %49 = tpu.matmul %46, %48, %cst_25 {dimension_numbers = #tpu.dot_dimension_numbers<[1], [0], [0], [1], [0, 0, 1, 1], [], []>} : vector<64x32xf32>, vector<32x128xf32>, vector<64x128xf32> -> vector<64x128xf32>
      %50 = arith.addf %43, %49 : vector<64x128xf32>
      %c1_26 = arith.constant 1 : index
      %51 = arith.index_cast %1 : i32 to index
      %c0_27 = arith.constant 0 : index
      %52 = vector.load %arg7[%c1_26, %51, %c0_27] : memref<3x64x32xf32, #tpu.memory_space<vmem>>, vector<1x64x32xf32>
      %53 = vector.shape_cast %52 : vector<1x64x32xf32> to vector<64x32xf32>
      %c2 = arith.constant 2 : index
      %c0_28 = arith.constant 0 : index
      %c0_29 = arith.constant 0 : index
      %54 = vector.load %arg4[%c2, %c0_28, %c0_29] : memref<4x32x128xf32, #tpu.memory_space<vmem>>, vector<1x32x128xf32>
      %55 = vector.shape_cast %54 : vector<1x32x128xf32> to vector<32x128xf32>
      %cst_30 = arith.constant dense<0.000000e+00> : vector<64x128xf32>
      %56 = tpu.matmul %53, %55, %cst_30 {dimension_numbers = #tpu.dot_dimension_numbers<[1], [0], [0], [1], [0, 0, 1, 1], [], []>} : vector<64x32xf32>, vector<32x128xf32>, vector<64x128xf32> -> vector<64x128xf32>
      %57 = arith.addf %50, %56 : vector<64x128xf32>
      %c2_31 = arith.constant 2 : index
      %58 = arith.index_cast %1 : i32 to index
      %c0_32 = arith.constant 0 : index
      %59 = vector.load %arg7[%c2_31, %58, %c0_32] : memref<3x64x32xf32, #tpu.memory_space<vmem>>, vector<1x64x32xf32>
      %60 = vector.shape_cast %59 : vector<1x64x32xf32> to vector<64x32xf32>
      %c3 = arith.constant 3 : index
      %c0_33 = arith.constant 0 : index
      %c0_34 = arith.constant 0 : index
      %61 = vector.load %arg4[%c3, %c0_33, %c0_34] : memref<4x32x128xf32, #tpu.memory_space<vmem>>, vector<1x32x128xf32>
      %62 = vector.shape_cast %61 : vector<1x32x128xf32> to vector<32x128xf32>
      %cst_35 = arith.constant dense<0.000000e+00> : vector<64x128xf32>
      %63 = tpu.matmul %60, %62, %cst_35 {dimension_numbers = #tpu.dot_dimension_numbers<[1], [0], [0], [1], [0, 0, 1, 1], [], []>} : vector<64x32xf32>, vector<32x128xf32>, vector<64x128xf32> -> vector<64x128xf32>
      %64 = arith.addf %57, %63 : vector<64x128xf32>
      %c0_36 = arith.constant 0 : index
      %c0_37 = arith.constant 0 : index
      %65 = vector.load %arg6[%c0_36, %c0_37] : memref<64x128xf32, #tpu.memory_space<vmem>>, vector<64x128xf32>
      tpu.vector_store %arg6[%c0_36, %c0_37], %64 {strides = array<i32>} : memref<64x128xf32, #tpu.memory_space<vmem>>, vector<64x128xf32>,
    } else {
    }
    return
  }
  func.func @transform_0(%arg0: i32, %arg1: i32) -> (i32, i32) {
    %c0_i32 = arith.constant 0 : i32
    %c0_i32_0 = arith.constant 0 : i32
    %c0_i32_1 = arith.constant 0 : i32
    return %c0_i32, %c0_i32_0 : i32, i32
  }
  func.func @transform_1(%arg0: i32, %arg1: i32) -> (i32, i32) {
    %c0_i32 = arith.constant 0 : i32
    %c0_i32_0 = arith.constant 0 : i32
    %c0_i32_1 = arith.constant 0 : i32
    return %c0_i32, %c0_i32_0 : i32, i32
  }
  func.func @transform_2(%arg0: i32, %arg1: i32) -> (i32, i32, i32) {
    %c0_i32 = arith.constant 0 : i32
    %c0_i32_0 = arith.constant 0 : i32
    %c0_i32_1 = arith.constant 0 : i32
    %c0_i32_2 = arith.constant 0 : i32
    return %c0_i32, %c0_i32_0, %c0_i32_1 : i32, i32, i32
  }
  func.func @transform_3(%arg0: i32, %arg1: i32) -> (i32, i32) {
    %c0_i32 = arith.constant 0 : i32
    %c0_i32_0 = arith.constant 0 : i32
    %c0_i32_1 = arith.constant 0 : i32
    return %c0_i32, %c0_i32_0 : i32, i32
  }
  func.func @transform_4(%arg0: i32, %arg1: i32) -> (i32, i32) {
    %c2_i32 = arith.constant 2 : i32
    %0 = arith.cmpi eq, %arg0, %c2_i32 : i32
    %c0_i32 = arith.constant 0 : i32
    %1 = arith.select %0, %arg1, %c0_i32 : i32
    %c0_i32_0 = arith.constant 0 : i32
    %c0_i32_1 = arith.constant 0 : i32
    return %1, %c0_i32_0 : i32, i32
  }
}

</mosaic_0001>

<llo_original>
// kernel: tpu_custom_call.1
$region0: #{tpu_custom_call.1}
  #allocation0 [shape = 'u32[]', space=smem, size = 0x4, offset = 0x4, fixed_abs, tag = 'smem constant byte address 0x4 - core index']
  #allocation1 [shape = 'u32[144,128]{1,0:T(1,128)}', space=vmem, size = 0x12000, scoped, tag = 'internal scratch']
  #allocation2 [shape = 'f32[3,64,32]{2,1,0:T(8,128)}', space=vmem, size = 0x18000, scoped, tag = 'scratch operand']
  %s0 = inlined_call_operand.vmem [shape: f32[64,64], index: 0, kind: input, shape index: {}]
  %s1 = inlined_call_operand.vmem [shape: f32[64,32], index: 1, kind: input, shape index: {}]
  %s2 = inlined_call_operand.hbm [shape: f32[4,32,128], index: 2, kind: input, shape index: {}]
  %s3 = inlined_call_operand.vmem [shape: f32[1,128], index: 3, kind: input, shape index: {}]
  %s4 = inlined_call_operand.hbm [shape: f32[64,128], index: 4, kind: output, shape index: {}]
  %s5 = sld [smem:[#allocation0]]
  $region57: #{tpu_custom_call.1} parent=0
    _
  %s7 = ssub.s32 1, %s5
  %s8 = scalar_select 0, %s7, %s5
  $region1: #{tpu_custom_call.1} parent=0
    #allocation3 [shape = 'u8[65536]{0}', space=vmem, size = 0x10000, scoped, tag = 'input window, operand 2, single buffered']
    #allocation4 [shape = 's32[2]{0}', space=sflag, size = 0x8, scoped, tag = 'scoped memory for tpu_custom_call.1']
    #allocation5 [shape = 's32[2]{0}', space=sflag, size = 0x8, scoped, tag = 'scoped memory for tpu_custom_call.1']
    #allocation6 [shape = 'u8[65536]{0}', space=vmem, size = 0x10000, scoped, tag = 'output window, operand 0']
    %9 = vsyncpa [#allocation4], 0
    %10 = vsyncpa [#allocation5], 0
    %s11 = scalar_lea.sflag [#allocation5], 1
    %12 = vsyncpa %s11, 0
    loop: start=0, step=1, limit=5
    $region2: #{tpu_custom_call.1} parent=1 // loop_pre_header
      _
    $region3: #{tpu_custom_call.1} parent=1 // loop_header
      %s14 = sphi 0, %s18
      %p15 = scmp.ge.s32.totalorder %s14, 5
      %s21 = sphi 0, %s33
      %s22 = sphi 0, %s29
      %s23 = sphi 0, %s21
      %s24 = sphi 0, %s22
      %s25 = sphi 0, %s23
      %s26 = sphi 0, %s24
      %s34 = sphi 0, %s34
      %s36 = sphi 0, %s34
      %s37 = sphi 0, %s36
      %s51 = sphi 0, %s37
      %s55 = sphi 0, %s55
      %s57 = sphi 0, %s55
      %s58 = sphi 0, %s57
      %s72 = sphi 0, %s58
      %s76 = sphi 0, %s76
      %s78 = sphi 0, %s76
      %s79 = sphi 0, %s78
      %s93 = sphi 0, %s79
      %s97 = sphi 0, %s97
      %s99 = sphi 0, %s97
      %s100 = sphi 0, %s99
      %s114 = sphi 0, %s100
      %s124 = sphi 0, %s126
      %s127 = sphi 0, %s124
      %s128 = sphi 0, %s127
      %s144 = sphi 0, %s128
    $region4: #{tpu_custom_call.1} parent=1 // loop_header_branch
      %17 = sbr.rel (%p15) target = $region8
    $region5: #{tpu_custom_call.1} parent=1 // loop_body
      %s19 = ssub.s32 %s14, 1
      %s20 = ssub.s32 %s14, 2
      %s27 = sadd.s32 1, %s22
      %p28 = scmp.ge.s32.totalorder %s27, 1
      %s29 = scalar_select %p28, 0, %s27
      %s30 = sadd.s32 1, %s21
      %s31 = scalar_select %p28, %s30, %s21
      %p32 = scmp.ge.s32.totalorder %s31, 3
      %s33 = scalar_select %p32, 0, %s31
      %s35 = sadd.s32 %s34, 1
      %p38 = scmp.eq.s32.totalorder %s14, 2
      %p39 = scmp.ne.s32.totalorder %s34, %s36
      %p40 = scmp.eq.s32.totalorder %s14, 0
      %p41 = por %p39, %p40
      %p42 = scmp.ne.s32.totalorder %s34, %s36
      %p43 = scmp.eq.s32.totalorder %s19, 2
      %p44 = por %p42, %p43
      %p45 = scmp.ne.s32.totalorder %s36, %s37
      %p46 = scmp.eq.s32.totalorder %s19, 0
      %p47 = por %p45, %p46
      %p48 = scmp.ne.s32.totalorder %s36, %s37
      %p49 = scmp.eq.s32.totalorder %s20, 2
      %p50 = por %p48, %p49
      %p52 = scmp.ne.s32.totalorder %s37, %s51
      %p53 = scmp.eq.s32.totalorder %s20, 0
      %p54 = por %p52, %p53
      %s56 = sadd.s32 %s55, 1
      %p59 = scmp.eq.s32.totalorder %s14, 2
      %p60 = scmp.ne.s32.totalorder %s55, %s57
      %p61 = scmp.eq.s32.totalorder %s14, 0
      %p62 = por %p60, %p61
      %p63 = scmp.ne.s32.totalorder %s55, %s57
      %p64 = scmp.eq.s32.totalorder %s19, 2
      %p65 = por %p63, %p64
      %p66 = scmp.ne.s32.totalorder %s57, %s58
      %p67 = scmp.eq.s32.totalorder %s19, 0
      %p68 = por %p66, %p67
      %p69 = scmp.ne.s32.totalorder %s57, %s58
      %p70 = scmp.eq.s32.totalorder %s20, 2
      %p71 = por %p69, %p70
      %p73 = scmp.ne.s32.totalorder %s58, %s72
      %p74 = scmp.eq.s32.totalorder %s20, 0
      %p75 = por %p73, %p74
      %s77 = sadd.s32 %s76, 1
      %p80 = scmp.eq.s32.totalorder %s14, 2
      %p81 = scmp.ne.s32.totalorder %s76, %s78
      %p82 = scmp.eq.s32.totalorder %s14, 0
      %p83 = por %p81, %p82
      %p84 = scmp.ne.s32.totalorder %s76, %s78
      %p85 = scmp.eq.s32.totalorder %s19, 2
      %p86 = por %p84, %p85
      %p87 = scmp.ne.s32.totalorder %s78, %s79
      %p88 = scmp.eq.s32.totalorder %s19, 0
      %p89 = por %p87, %p88
      %p90 = scmp.ne.s32.totalorder %s78, %s79
      %p91 = scmp.eq.s32.totalorder %s20, 2
      %p92 = por %p90, %p91
      %p94 = scmp.ne.s32.totalorder %s79, %s93
      %p95 = scmp.eq.s32.totalorder %s20, 0
      %p96 = por %p94, %p95
      %s98 = sadd.s32 %s97, 1
      %p101 = scmp.eq.s32.totalorder %s14, 2
      %p102 = scmp.ne.s32.totalorder %s97, %s99
      %p103 = scmp.eq.s32.totalorder %s14, 0
      %p104 = por %p102, %p103
      %p105 = scmp.ne.s32.totalorder %s97, %s99
      %p106 = scmp.eq.s32.totalorder %s19, 2
      %p107 = por %p105, %p106
      %p108 = scmp.ne.s32.totalorder %s99, %s100
      %p109 = scmp.eq.s32.totalorder %s19, 0
      %p110 = por %p108, %p109
      %p111 = scmp.ne.s32.totalorder %s99, %s100
      %p112 = scmp.eq.s32.totalorder %s20, 2
      %p113 = por %p111, %p112
      %p115 = scmp.ne.s32.totalorder %s100, %s114
      %p116 = scmp.eq.s32.totalorder %s20, 0
      %p117 = por %p115, %p116
      %p118 = scmp.eq.s32.totalorder %s21, 2
      %s119 = scalar_select %p118, %s22, 0
      %p120 = scmp.eq.s32.totalorder %s33, 2
      %s121 = scalar_select %p120, %s29, 0
      %s122 = ssub.s32 %s119, %s121
      %p123 = scmp.eq.s32.totalorder %s122, 0
      %s125 = sadd.s32 %s124, 1
      %s126 = scalar_select %p123, %s124, %s125
      %p129 = pneg %p123
      %p130 = scmp.eq.s32.totalorder %s14, 2
      %p131 = por %p129, %p130
      %p132 = scmp.ne.s32.totalorder %s124, %s127
      %p133 = scmp.eq.s32.totalorder %s14, 0
      %p134 = por %p132, %p133
      %p135 = scmp.ne.s32.totalorder %s124, %s127
      %p136 = scmp.eq.s32.totalorder %s19, 2
      %p137 = por %p135, %p136
      %p138 = scmp.ne.s32.totalorder %s127, %s128
      %p139 = scmp.eq.s32.totalorder %s19, 0
      %p140 = por %p138, %p139
      %p141 = scmp.ne.s32.totalorder %s127, %s128
      %p142 = scmp.eq.s32.totalorder %s20, 2
      %p143 = por %p141, %p142
      %p145 = scmp.ne.s32.totalorder %s128, %s144
      %p146 = scmp.eq.s32.totalorder %s20, 0
      %p147 = por %p145, %p146
      %p148 = scmp.le.s32.totalorder 1, %s14
      %p149 = scmp.lt.s32.totalorder %s14, 4
      %p150 = pnand %p148, %p149
      %p151 = pneg %p150
      // Predicated region
      $region9: #{tpu_custom_call.1} parent=5 // pred_check
        _
      $region10: #{tpu_custom_call.1} parent=5 // pred_check_branch
        %153 = sbr.rel (%p150) target = $region12
      $region11: #{tpu_custom_call.1} parent=5 // pred_region
        %s154 = ssub.s32 %s14, 1
        // Predicated region
        $region13: #{tpu_custom_call.1} parent=11 // pred_check
          %p155 = pneg %p47
        $region14: #{tpu_custom_call.1} parent=11 // pred_check_branch
          %157 = sbr.rel (%p155) target = $region16
        $region15: #{tpu_custom_call.1} parent=11 // pred_region
          _
        $region16: #{tpu_custom_call.1} parent=11 // pred_fallthru
          _
        // Predicated region
        $region17: #{tpu_custom_call.1} parent=11 // pred_check
          %p158 = pneg %p68
        $region18: #{tpu_custom_call.1} parent=11 // pred_check_branch
          %160 = sbr.rel (%p158) target = $region20
        $region19: #{tpu_custom_call.1} parent=11 // pred_region
          _
        $region20: #{tpu_custom_call.1} parent=11 // pred_fallthru
          _
        // Predicated region
        $region21: #{tpu_custom_call.1} parent=11 // pred_check
          %p161 = pneg %p89
        $region22: #{tpu_custom_call.1} parent=11 // pred_check_branch
          %163 = sbr.rel (%p161) target = $region24
        $region23: #{tpu_custom_call.1} parent=11 // pred_region
          %s165 = ssub.s32 2048, 2048
          %166 = vsyncadd [#allocation4], %s165
          %s167 = sshll.u32 [#allocation3], 4
          %s168 = int_to_ptr.vmem [resolvable:$true] %s167
          %173 = dma.hbm_to_vmem [thread:$0]  %s2, 2048, %s168, [#allocation4], 128, 128, 8
        $region24: #{tpu_custom_call.1} parent=11 // pred_fallthru
          _
        // Predicated region
        $region25: #{tpu_custom_call.1} parent=11 // pred_check
          %p174 = pneg %p110
        $region26: #{tpu_custom_call.1} parent=11 // pred_check_branch
          %176 = sbr.rel (%p174) target = $region28
        $region27: #{tpu_custom_call.1} parent=11 // pred_region
          _
        $region28: #{tpu_custom_call.1} parent=11 // pred_fallthru
          _
      $region12: #{tpu_custom_call.1} parent=5 // pred_fallthru
        _
      %p177 = scmp.lt.s32.totalorder %s14, 3
      // Predicated region
      $region29: #{tpu_custom_call.1} parent=5 // pred_check
        %p178 = pneg %p177
      $region30: #{tpu_custom_call.1} parent=5 // pred_check_branch
        %180 = sbr.rel (%p178) target = $region32
      $region31: #{tpu_custom_call.1} parent=5 // pred_region
        _
      $region32: #{tpu_custom_call.1} parent=5 // pred_fallthru
        _
      %p181 = scmp.le.s32.totalorder 1, %s14
      %p182 = scmp.lt.s32.totalorder %s14, 4
      %p183 = pnand %p181, %p182
      %p184 = pneg %p183
      // Predicated region
      $region33: #{tpu_custom_call.1} parent=5 // pred_check
        _
      $region34: #{tpu_custom_call.1} parent=5 // pred_check_branch
        %186 = sbr.rel (%p183) target = $region36
      $region35: #{tpu_custom_call.1} parent=5 // pred_region
        %s187 = ssub.s32 %s14, 1
        // Predicated region
        $region37: #{tpu_custom_call.1} parent=35 // pred_check
          %p188 = pneg %p89
        $region38: #{tpu_custom_call.1} parent=35 // pred_check_branch
          %190 = sbr.rel (%p188) target = $region40
        $region39: #{tpu_custom_call.1} parent=35 // pred_region
          %191 = dma.done [#allocation4], 2048
        $region40: #{tpu_custom_call.1} parent=35 // pred_fallthru
          _
        %p192 = pneg %p47
        %p193 = pneg %p44
        %p194 = pneg %p68
        %p195 = pneg %p65
        %p196 = pneg %p89
        %p197 = pneg %p86
        %p198 = pneg %p110
        %p199 = pneg %p107
        %p200 = pneg %p140
        %p201 = pneg %p137
        %s202 = sand.u32 %s127, 1
        %s203 = scalar_lea.sflag [#allocation5], %s202
        %s204 = sand.u32 %s127, 1
        %s205 = smul.addr %s204, 64
        %s206 = scalar_lea.vmem [#allocation6], %s205
        %p207 = scmp.eq.s32.totalorder %s23, 2
        %s208 = scalar_select %p207, %s24, 0
        %s209 = smul.u32 8, %s208
        %s210 = smul.u32 %s24, 64
        %s211 = scalar_lea.vmem %s0, %s210
        %v212 = vld [vmem:[%s211] sm:$0xff]
        %v213 = vld [vmem:[%s211 + $0x8] sm:$0xff]
        %v214 = vld [vmem:[%s211 + $0x10] sm:$0xff]
        %v215 = vld [vmem:[%s211 + $0x18] sm:$0xff]
        %v216 = vld [vmem:[%s211 + $0x20] sm:$0xff]
        %v217 = vld [vmem:[%s211 + $0x28] sm:$0xff]
        %v218 = vld [vmem:[%s211 + $0x30] sm:$0xff]
        %v219 = vld [vmem:[%s211 + $0x38] sm:$0xff]
        %p220 = scmp.eq.s32.totalorder %s23, 0
        %v221 = vld [vmem:[%s1] sm:$0xff]
        %v222 = vld [vmem:[%s1 + $0x8] sm:$0xff]
        %v223 = vld [vmem:[%s1 + $0x10] sm:$0xff]
        %v224 = vld [vmem:[%s1 + $0x18] sm:$0xff]
        %v225 = vld [vmem:[%s1 + $0x20] sm:$0xff]
        %v226 = vld [vmem:[%s1 + $0x28] sm:$0xff]
        %v227 = vld [vmem:[%s1 + $0x30] sm:$0xff]
        %v228 = vld [vmem:[%s1 + $0x38] sm:$0xff]
        %p229 = scmp.gt.s32.totalorder %s23, 1
        %s230 = scalar_select %p229, %s23, 1
        %s231 = ssub.s32 %s230, 1
        %s232 = smul.u32 %s231, 64
        %s233 = scalar_lea.vmem [#allocation2], %s232
        %v234 = vld [vmem:[%s233] sm:$0xff]
        %v235 = vld [vmem:[%s233 + $0x8] sm:$0xff]
        %v236 = vld [vmem:[%s233 + $0x10] sm:$0xff]
        %v237 = vld [vmem:[%s233 + $0x18] sm:$0xff]
        %v238 = vld [vmem:[%s233 + $0x20] sm:$0xff]
        %v239 = vld [vmem:[%s233 + $0x28] sm:$0xff]
        %v240 = vld [vmem:[%s233 + $0x30] sm:$0xff]
        %v241 = vld [vmem:[%s233 + $0x38] sm:$0xff]
        %s242 = scalar_select %p220, 1, 0
        %v243 = vstv %s242
        %vm244 = vcmp.eq.s32.totalorder %v243, 1
        %v245 = vsel %vm244, %v221, %v234
        %v246 = vsel %vm244, %v222, %v235
        %v247 = vsel %vm244, %v223, %v236
        %v248 = vsel %vm244, %v224, %v237
        %v249 = vsel %vm244, %v225, %v238
        %v250 = vsel %vm244, %v226, %v239
        %v251 = vsel %vm244, %v227, %v240
        %v252 = vsel %vm244, %v228, %v241
        %vm253 = vcmask 523264
        %v255 = vsel %vm253, %v212, 0
        %v258 = vsel %vm253, %v213, 0
        %v261 = vsel %vm253, %v214, 0
        %v264 = vsel %vm253, %v215, 0
        %v267 = vsel %vm253, %v216, 0
        %v270 = vsel %vm253, %v217, 0
        %v273 = vsel %vm253, %v218, 0
        %v276 = vsel %vm253, %v219, 0
        %278 = vmatprep.subr.mxu0 0.0
        %279 = vmatpush1.msra.mxu0 0.0
        %280 = vmatprep.subr.mxu0 0.0
        %281 = vmatpush1.msra.mxu0 0.0
        %282 = vmatprep.subr.mxu0 0.0
        %283 = vmatpush1.msra.mxu0 0.0
        %284 = vmatprep.subr.mxu0 0.0
        %285 = vmatpush1.msra.mxu0 0.0
        %286 = vmatprep.subr.mxu0 0.0
        %287 = vmatpush1.msra.mxu0 0.0
        %288 = vmatprep.subr.mxu0 0.0
        %289 = vmatpush1.msra.mxu0 0.0
        %290 = vmatprep.subr.mxu0 0.0
        %291 = vmatpush1.msra.mxu0 0.0
        %292 = vmatprep.subr.mxu0 0.0
        %293 = vmatpush1.msra.mxu0 0.0
        %294 = vmatprep.subr.mxu0 0.0
        %295 = vmatpush1.msra.mxu0 %v252
        %296 = vmatprep.subr.mxu0 0.0
        %297 = vmatpush1.msra.mxu0 %v251
        %298 = vmatprep.subr.mxu0 0.0
        %299 = vmatpush1.msra.mxu0 %v250
        %300 = vmatprep.subr.mxu0 0.0
        %301 = vmatpush1.msra.mxu0 %v249
        %302 = vmatprep.subr.mxu0 0.0
        %303 = vmatpush1.msra.mxu0 %v248
        %304 = vmatprep.subr.mxu0 0.0
        %305 = vmatpush1.msra.mxu0 %v247
        %306 = vmatprep.subr.mxu0 0.0
        %307 = vmatpush1.msra.mxu0 %v246
        %308 = vmatprep.subr.mxu0 0.0
        %309 = vmatpush1.msra.mxu0 %v245
        %310 = vmatprep.subr.mxu0 0.0
        %311 = vmatpush2.msra.mxu0 0.0
        %312 = vmatprep.subr.mxu0 0.0
        %313 = vmatpush2.msra.mxu0 0.0
        %314 = vmatprep.subr.mxu0 0.0
        %315 = vmatpush2.msra.mxu0 0.0
        %316 = vmatprep.subr.mxu0 0.0
        %317 = vmatpush2.msra.mxu0 0.0
        %318 = vmatprep.subr.mxu0 0.0
        %319 = vmatpush2.msra.mxu0 0.0
        %320 = vmatprep.subr.mxu0 0.0
        %321 = vmatpush2.msra.mxu0 0.0
        %322 = vmatprep.subr.mxu0 0.0
        %323 = vmatpush2.msra.mxu0 0.0
        %324 = vmatprep.subr.mxu0 0.0
        %325 = vmatpush2.msra.mxu0 0.0
        %326 = vmatprep.subr.mxu0 0.0
        %327 = vmatpush2.msra.mxu0 0.0
        %328 = vmatprep.subr.mxu0 0.0
        %329 = vmatpush2.msra.mxu0 0.0
        %330 = vmatprep.subr.mxu0 0.0
        %331 = vmatpush2.msra.mxu0 0.0
        %332 = vmatprep.subr.mxu0 0.0
        %333 = vmatpush2.msra.mxu0 0.0
        %334 = vmatprep.subr.mxu0 0.0
        %335 = vmatpush2.msra.mxu0 0.0
        %336 = vmatprep.subr.mxu0 0.0
        %337 = vmatpush2.msra.mxu0 0.0
        %338 = vmatprep.subr.mxu0 0.0
        %339 = vmatpush2.msra.mxu0 0.0
        %340 = vmatprep.subr.mxu0 0.0
        %341 = vmatpush2.msra.mxu0 0.0
        %342 = vmatprep.mubr.f32.mxu0 0.0
        %343 = vmatmul.mubr.f32.gmra.mxu0 %v255
        %v344 = vpop.f32.mrf.mxu0
        %v345 = vadd.f32 0.0, %v344
        %v346 = vpop.f32.mrf.mxu0
        %347 = vmatprep.mubr.f32.mxu0 0.0
        %348 = vmatmul.mubr.f32.gmra.mxu0 %v258
        %v349 = vpop.f32.mrf.mxu0
        %v350 = vadd.f32 0.0, %v349
        %v351 = vpop.f32.mrf.mxu0
        %352 = vmatprep.mubr.f32.mxu0 0.0
        %353 = vmatmul.mubr.f32.gmra.mxu0 %v261
        %v354 = vpop.f32.mrf.mxu0
        %v355 = vadd.f32 0.0, %v354
        %v356 = vpop.f32.mrf.mxu0
        %357 = vmatprep.mubr.f32.mxu0 0.0
        %358 = vmatmul.mubr.f32.gmra.mxu0 %v264
        %v359 = vpop.f32.mrf.mxu0
        %v360 = vadd.f32 0.0, %v359
        %v361 = vpop.f32.mrf.mxu0
        %362 = vmatprep.mubr.f32.mxu0 0.0
        %363 = vmatmul.mubr.f32.gmra.mxu0 %v267
        %v364 = vpop.f32.mrf.mxu0
        %v365 = vadd.f32 0.0, %v364
        %v366 = vpop.f32.mrf.mxu0
        %367 = vmatprep.mubr.f32.mxu0 0.0
        %368 = vmatmul.mubr.f32.gmra.mxu0 %v270
        %v369 = vpop.f32.mrf.mxu0
        %v370 = vadd.f32 0.0, %v369
        %v371 = vpop.f32.mrf.mxu0
        %372 = vmatprep.mubr.f32.mxu0 0.0
        %373 = vmatmul.mubr.f32.gmra.mxu0 %v273
        %v374 = vpop.f32.mrf.mxu0
        %v375 = vadd.f32 0.0, %v374
        %v376 = vpop.f32.mrf.mxu0
        %377 = vmatprep.mubr.f32.mxu0 0.0
        %378 = vmatmul.mubr.f32.gmra.mxu0 %v276
        %v379 = vpop.f32.mrf.mxu0
        %v380 = vadd.f32 0.0, %v379
        %v381 = vpop.f32.mrf.mxu0
        %382 = vdwg.mxu0
        %p383 = scmp.le.s32.totalorder %s23, 1
        %s384 = scalar_lea.vmem %s1, %s210
        %v385 = vld [vmem:[%s384] sm:$0xff]
        %v386 = vld [vmem:[%s384 + $0x8] sm:$0xff]
        %v387 = vld [vmem:[%s384 + $0x10] sm:$0xff]
        %v388 = vld [vmem:[%s384 + $0x18] sm:$0xff]
        %v389 = vld [vmem:[%s384 + $0x20] sm:$0xff]
        %v390 = vld [vmem:[%s384 + $0x28] sm:$0xff]
        %v391 = vld [vmem:[%s384 + $0x30] sm:$0xff]
        %v392 = vld [vmem:[%s384 + $0x38] sm:$0xff]
        %p393 = scmp.gt.s32.totalorder %s23, 2
        %s394 = scalar_select %p393, %s23, 2
        %s395 = ssub.s32 %s394, 2
        %s396 = smul.u32 %s395, 64
        %s397 = sadd.s32 %s210, %s396
        %s398 = scalar_lea.vmem [#allocation2], %s397
        %v399 = vld [vmem:[%s398] sm:$0xff]
        %v400 = vld [vmem:[%s398 + $0x8] sm:$0xff]
        %v401 = vld [vmem:[%s398 + $0x10] sm:$0xff]
        %v402 = vld [vmem:[%s398 + $0x18] sm:$0xff]
        %v403 = vld [vmem:[%s398 + $0x20] sm:$0xff]
        %v404 = vld [vmem:[%s398 + $0x28] sm:$0xff]
        %v405 = vld [vmem:[%s398 + $0x30] sm:$0xff]
        %v406 = vld [vmem:[%s398 + $0x38] sm:$0xff]
        %s407 = scalar_select %p383, 1, 0
        %v408 = vstv %s407
        %vm409 = vcmp.eq.s32.totalorder %v408, 1
        %v410 = vsel %vm409, %v385, %v399
        %v411 = vsel %vm409, %v386, %v400
        %v412 = vsel %vm409, %v387, %v401
        %v413 = vsel %vm409, %v388, %v402
        %v414 = vsel %vm409, %v389, %v403
        %v415 = vsel %vm409, %v390, %v404
        %v416 = vsel %vm409, %v391, %v405
        %v417 = vsel %vm409, %v392, %v406
        %v418 = vmul.f32 %v345, 2.0
        %v419 = vmul.f32 %v350, 2.0
        %v420 = vmul.f32 %v355, 2.0
        %v421 = vmul.f32 %v360, 2.0
        %v422 = vmul.f32 %v365, 2.0
        %v423 = vmul.f32 %v370, 2.0
        %v424 = vmul.f32 %v375, 2.0
        %v425 = vmul.f32 %v380, 2.0
        %v426 = vsub.f32 %v418, %v410
        %v427 = vsub.f32 %v419, %v411
        %v428 = vsub.f32 %v420, %v412
        %v429 = vsub.f32 %v421, %v413
        %v430 = vsub.f32 %v422, %v414
        %v431 = vsub.f32 %v423, %v415
        %v432 = vsub.f32 %v424, %v416
        %v433 = vsub.f32 %v425, %v417
        %v434 = vsel %vm244, %v345, %v426
        %v435 = vsel %vm244, %v350, %v427
        %v436 = vsel %vm244, %v355, %v428
        %v437 = vsel %vm244, %v360, %v429
        %v438 = vsel %vm244, %v365, %v430
        %v439 = vsel %vm244, %v370, %v431
        %v440 = vsel %vm244, %v375, %v432
        %v441 = vsel %vm244, %v380, %v433
        %s442 = smul.u32 %s23, 64
        %s443 = sadd.s32 %s210, %s442
        %s444 = scalar_lea.vmem [#allocation2], %s443
        %vm445 = vcmask 261120
        %446 = vst.msk [vmem:[%s444] sm:$0xff] %vm445, %v434
        %447 = vst.msk [vmem:[%s444 + $0x8] sm:$0xff] %vm445, %v435
        %448 = vst.msk [vmem:[%s444 + $0x10] sm:$0xff] %vm445, %v436
        %449 = vst.msk [vmem:[%s444 + $0x18] sm:$0xff] %vm445, %v437
        %450 = vst.msk [vmem:[%s444 + $0x20] sm:$0xff] %vm445, %v438
        %451 = vst.msk [vmem:[%s444 + $0x28] sm:$0xff] %vm445, %v439
        %452 = vst.msk [vmem:[%s444 + $0x30] sm:$0xff] %vm445, %v440
        %453 = vst.msk [vmem:[%s444 + $0x38] sm:$0xff] %vm445, %v441
        %p454 = scmp.eq.s32.totalorder %s23, 2
        // Predicated region
        $region41: #{tpu_custom_call.1} parent=35 // pred_check
          %p455 = pneg %p454
        $region42: #{tpu_custom_call.1} parent=35 // pred_check_branch
          %457 = sbr.rel (%p455) target = $region44
        $region43: #{tpu_custom_call.1} parent=35 // pred_region
          %v458 = vld [vmem:[%s384] sm:$0xff]
          %v459 = vld [vmem:[%s384 + $0x8] sm:$0xff]
          %v460 = vld [vmem:[%s384 + $0x10] sm:$0xff]
          %v461 = vld [vmem:[%s384 + $0x18] sm:$0xff]
          %v462 = vld [vmem:[%s384 + $0x20] sm:$0xff]
          %v463 = vld [vmem:[%s384 + $0x28] sm:$0xff]
          %v464 = vld [vmem:[%s384 + $0x30] sm:$0xff]
          %v465 = vld [vmem:[%s384 + $0x38] sm:$0xff]
          %v466 = vld [vmem:[#allocation3] sm:$0xff]
          %v467 = vld [vmem:[#allocation3 + $0x8] sm:$0xff]
          %v468 = vld [vmem:[#allocation3 + $0x10] sm:$0xff]
          %v469 = vld [vmem:[#allocation3 + $0x18] sm:$0xff]
          %v470 = vld [vmem:[%s3] sm:$0x1]
          %v472 = vlaneseq
          %v473 = vshrl.u32 %v472, 7
          %v474 = vsub.s32 0, %v473
          %v475 = vrot.slane %v470, %v474
          %v478 = vsel %vm445, %v458, 0
          %v481 = vsel %vm445, %v459, 0
          %v484 = vsel %vm445, %v460, 0
          %v487 = vsel %vm445, %v461, 0
          %v490 = vsel %vm445, %v462, 0
          %v493 = vsel %vm445, %v463, 0
          %v496 = vsel %vm445, %v464, 0
          %v499 = vsel %vm445, %v465, 0
          %501 = vmatprep.subr.mxu0 0.0
          %502 = vmatpush1.msra.mxu0 0.0
          %503 = vmatprep.subr.mxu0 0.0
          %504 = vmatpush1.msra.mxu0 0.0
          %505 = vmatprep.subr.mxu0 0.0
          %506 = vmatpush1.msra.mxu0 0.0
          %507 = vmatprep.subr.mxu0 0.0
          %508 = vmatpush1.msra.mxu0 0.0
          %509 = vmatprep.subr.mxu0 0.0
          %510 = vmatpush1.msra.mxu0 0.0
          %511 = vmatprep.subr.mxu0 0.0
          %512 = vmatpush1.msra.mxu0 0.0
          %513 = vmatprep.subr.mxu0 0.0
          %514 = vmatpush1.msra.mxu0 0.0
          %515 = vmatprep.subr.mxu0 0.0
          %516 = vmatpush1.msra.mxu0 0.0
          %517 = vmatprep.subr.mxu0 0.0
          %518 = vmatpush1.msra.mxu0 0.0
          %519 = vmatprep.subr.mxu0 0.0
          %520 = vmatpush1.msra.mxu0 0.0
          %521 = vmatprep.subr.mxu0 0.0
          %522 = vmatpush1.msra.mxu0 0.0
          %523 = vmatprep.subr.mxu0 0.0
          %524 = vmatpush1.msra.mxu0 0.0
          %525 = vmatprep.subr.mxu0 0.0
          %526 = vmatpush1.msra.mxu0 %v469
          %527 = vmatprep.subr.mxu0 0.0
          %528 = vmatpush1.msra.mxu0 %v468
          %529 = vmatprep.subr.mxu0 0.0
          %530 = vmatpush1.msra.mxu0 %v467
          %531 = vmatprep.subr.mxu0 0.0
          %532 = vmatpush1.msra.mxu0 %v466
          %533 = vmatprep.subr.mxu0 0.0
          %534 = vmatpush2.msra.mxu0 0.0
          %535 = vmatprep.subr.mxu0 0.0
          %536 = vmatpush2.msra.mxu0 0.0
          %537 = vmatprep.subr.mxu0 0.0
          %538 = vmatpush2.msra.mxu0 0.0
          %539 = vmatprep.subr.mxu0 0.0
          %540 = vmatpush2.msra.mxu0 0.0
          %541 = vmatprep.subr.mxu0 0.0
          %542 = vmatpush2.msra.mxu0 0.0
          %543 = vmatprep.subr.mxu0 0.0
          %544 = vmatpush2.msra.mxu0 0.0
          %545 = vmatprep.subr.mxu0 0.0
          %546 = vmatpush2.msra.mxu0 0.0
          %547 = vmatprep.subr.mxu0 0.0
          %548 = vmatpush2.msra.mxu0 0.0
          %549 = vmatprep.subr.mxu0 0.0
          %550 = vmatpush2.msra.mxu0 0.0
          %551 = vmatprep.subr.mxu0 0.0
          %552 = vmatpush2.msra.mxu0 0.0
          %553 = vmatprep.subr.mxu0 0.0
          %554 = vmatpush2.msra.mxu0 0.0
          %555 = vmatprep.subr.mxu0 0.0
          %556 = vmatpush2.msra.mxu0 0.0
          %557 = vmatprep.subr.mxu0 0.0
          %558 = vmatpush2.msra.mxu0 0.0
          %559 = vmatprep.subr.mxu0 0.0
          %560 = vmatpush2.msra.mxu0 0.0
          %561 = vmatprep.subr.mxu0 0.0
          %562 = vmatpush2.msra.mxu0 0.0
          %563 = vmatprep.subr.mxu0 0.0
          %564 = vmatpush2.msra.mxu0 0.0
          %565 = vmatprep.mubr.f32.mxu0 0.0
          %566 = vmatmul.mubr.f32.gmra.mxu0 %v478
          %v567 = vpop.f32.mrf.mxu0
          %v568 = vadd.f32 %v475, %v567
          %v569 = vpop.f32.mrf.mxu0
          %570 = vmatprep.mubr.f32.mxu0 0.0
          %571 = vmatmul.mubr.f32.gmra.mxu0 %v481
          %v572 = vpop.f32.mrf.mxu0
          %v573 = vadd.f32 %v475, %v572
          %v574 = vpop.f32.mrf.mxu0
          %575 = vmatprep.mubr.f32.mxu0 0.0
          %576 = vmatmul.mubr.f32.gmra.mxu0 %v484
          %v577 = vpop.f32.mrf.mxu0
          %v578 = vadd.f32 %v475, %v577
          %v579 = vpop.f32.mrf.mxu0
          %580 = vmatprep.mubr.f32.mxu0 0.0
          %581 = vmatmul.mubr.f32.gmra.mxu0 %v487
          %v582 = vpop.f32.mrf.mxu0
          %v583 = vadd.f32 %v475, %v582
          %v584 = vpop.f32.mrf.mxu0
          %585 = vmatprep.mubr.f32.mxu0 0.0
          %586 = vmatmul.mubr.f32.gmra.mxu0 %v490
          %v587 = vpop.f32.mrf.mxu0
          %v588 = vadd.f32 %v475, %v587
          %v589 = vpop.f32.mrf.mxu0
          %590 = vmatprep.mubr.f32.mxu0 0.0
          %591 = vmatmul.mubr.f32.gmra.mxu0 %v493
          %v592 = vpop.f32.mrf.mxu0
          %v593 = vadd.f32 %v475, %v592
          %v594 = vpop.f32.mrf.mxu0
          %595 = vmatprep.mubr.f32.mxu0 0.0
          %596 = vmatmul.mubr.f32.gmra.mxu0 %v496
          %v597 = vpop.f32.mrf.mxu0
          %v598 = vadd.f32 %v475, %v597
          %v599 = vpop.f32.mrf.mxu0
          %600 = vmatprep.mubr.f32.mxu0 0.0
          %601 = vmatmul.mubr.f32.gmra.mxu0 %v499
          %v602 = vpop.f32.mrf.mxu0
          %v603 = vadd.f32 %v475, %v602
          %v604 = vpop.f32.mrf.mxu0
          %605 = vdwg.mxu0
          %s606 = scalar_lea.vmem [#allocation2], %s210
          %v607 = vld [vmem:[%s606] sm:$0xff]
          %v608 = vld [vmem:[%s606 + $0x8] sm:$0xff]
          %v609 = vld [vmem:[%s606 + $0x10] sm:$0xff]
          %v610 = vld [vmem:[%s606 + $0x18] sm:$0xff]
          %v611 = vld [vmem:[%s606 + $0x20] sm:$0xff]
          %v612 = vld [vmem:[%s606 + $0x28] sm:$0xff]
          %v613 = vld [vmem:[%s606 + $0x30] sm:$0xff]
          %v614 = vld [vmem:[%s606 + $0x38] sm:$0xff]
          %s615 = scalar_lea.vmem [#allocation3], 32
          %v616 = vld [vmem:[%s615] sm:$0xff]
          %v617 = vld [vmem:[%s615 + $0x8] sm:$0xff]
          %v618 = vld [vmem:[%s615 + $0x10] sm:$0xff]
          %v619 = vld [vmem:[%s615 + $0x18] sm:$0xff]
          %v621 = vsel %vm445, %v607, 0
          %v624 = vsel %vm445, %v608, 0
          %v627 = vsel %vm445, %v609, 0
          %v630 = vsel %vm445, %v610, 0
          %v633 = vsel %vm445, %v611, 0
          %v636 = vsel %vm445, %v612, 0
          %v639 = vsel %vm445, %v613, 0
          %v642 = vsel %vm445, %v614, 0
          %644 = vmatprep.subr.mxu0 0.0
          %645 = vmatpush1.msra.mxu0 0.0
          %646 = vmatprep.subr.mxu0 0.0
          %647 = vmatpush1.msra.mxu0 0.0
          %648 = vmatprep.subr.mxu0 0.0
          %649 = vmatpush1.msra.mxu0 0.0
          %650 = vmatprep.subr.mxu0 0.0
          %651 = vmatpush1.msra.mxu0 0.0
          %652 = vmatprep.subr.mxu0 0.0
          %653 = vmatpush1.msra.mxu0 0.0
          %654 = vmatprep.subr.mxu0 0.0
          %655 = vmatpush1.msra.mxu0 0.0
          %656 = vmatprep.subr.mxu0 0.0
          %657 = vmatpush1.msra.mxu0 0.0
          %658 = vmatprep.subr.mxu0 0.0
          %659 = vmatpush1.msra.mxu0 0.0
          %660 = vmatprep.subr.mxu0 0.0
          %661 = vmatpush1.msra.mxu0 0.0
          %662 = vmatprep.subr.mxu0 0.0
          %663 = vmatpush1.msra.mxu0 0.0
          %664 = vmatprep.subr.mxu0 0.0
          %665 = vmatpush1.msra.mxu0 0.0
          %666 = vmatprep.subr.mxu0 0.0
          %667 = vmatpush1.msra.mxu0 0.0
          %668 = vmatprep.subr.mxu0 0.0
          %669 = vmatpush1.msra.mxu0 %v619
          %670 = vmatprep.subr.mxu0 0.0
          %671 = vmatpush1.msra.mxu0 %v618
          %672 = vmatprep.subr.mxu0 0.0
          %673 = vmatpush1.msra.mxu0 %v617
          %674 = vmatprep.subr.mxu0 0.0
          %675 = vmatpush1.msra.mxu0 %v616
          %676 = vmatprep.subr.mxu0 0.0
          %677 = vmatpush2.msra.mxu0 0.0
          %678 = vmatprep.subr.mxu0 0.0
          %679 = vmatpush2.msra.mxu0 0.0
          %680 = vmatprep.subr.mxu0 0.0
          %681 = vmatpush2.msra.mxu0 0.0
          %682 = vmatprep.subr.mxu0 0.0
          %683 = vmatpush2.msra.mxu0 0.0
          %684 = vmatprep.subr.mxu0 0.0
          %685 = vmatpush2.msra.mxu0 0.0
          %686 = vmatprep.subr.mxu0 0.0
          %687 = vmatpush2.msra.mxu0 0.0
          %688 = vmatprep.subr.mxu0 0.0
          %689 = vmatpush2.msra.mxu0 0.0
          %690 = vmatprep.subr.mxu0 0.0
          %691 = vmatpush2.msra.mxu0 0.0
          %692 = vmatprep.subr.mxu0 0.0
          %693 = vmatpush2.msra.mxu0 0.0
          %694 = vmatprep.subr.mxu0 0.0
          %695 = vmatpush2.msra.mxu0 0.0
          %696 = vmatprep.subr.mxu0 0.0
          %697 = vmatpush2.msra.mxu0 0.0
          %698 = vmatprep.subr.mxu0 0.0
          %699 = vmatpush2.msra.mxu0 0.0
          %700 = vmatprep.subr.mxu0 0.0
          %701 = vmatpush2.msra.mxu0 0.0
          %702 = vmatprep.subr.mxu0 0.0
          %703 = vmatpush2.msra.mxu0 0.0
          %704 = vmatprep.subr.mxu0 0.0
          %705 = vmatpush2.msra.mxu0 0.0
          %706 = vmatprep.subr.mxu0 0.0
          %707 = vmatpush2.msra.mxu0 0.0
          %708 = vmatprep.mubr.f32.mxu0 0.0
          %709 = vmatmul.mubr.f32.gmra.mxu0 %v621
          %v710 = vpop.f32.mrf.mxu0
          %v711 = vadd.f32 0.0, %v710
          %v712 = vpop.f32.mrf.mxu0
          %713 = vmatprep.mubr.f32.mxu0 0.0
          %714 = vmatmul.mubr.f32.gmra.mxu0 %v624
          %v715 = vpop.f32.mrf.mxu0
          %v716 = vadd.f32 0.0, %v715
          %v717 = vpop.f32.mrf.mxu0
          %718 = vmatprep.mubr.f32.mxu0 0.0
          %719 = vmatmul.mubr.f32.gmra.mxu0 %v627
          %v720 = vpop.f32.mrf.mxu0
          %v721 = vadd.f32 0.0, %v720
          %v722 = vpop.f32.mrf.mxu0
          %723 = vmatprep.mubr.f32.mxu0 0.0
          %724 = vmatmul.mubr.f32.gmra.mxu0 %v630
          %v725 = vpop.f32.mrf.mxu0
          %v726 = vadd.f32 0.0, %v725
          %v727 = vpop.f32.mrf.mxu0
          %728 = vmatprep.mubr.f32.mxu0 0.0
          %729 = vmatmul.mubr.f32.gmra.mxu0 %v633
          %v730 = vpop.f32.mrf.mxu0
          %v731 = vadd.f32 0.0, %v730
          %v732 = vpop.f32.mrf.mxu0
          %733 = vmatprep.mubr.f32.mxu0 0.0
          %734 = vmatmul.mubr.f32.gmra.mxu0 %v636
          %v735 = vpop.f32.mrf.mxu0
          %v736 = vadd.f32 0.0, %v735
          %v737 = vpop.f32.mrf.mxu0
          %738 = vmatprep.mubr.f32.mxu0 0.0
          %739 = vmatmul.mubr.f32.gmra.mxu0 %v639
          %v740 = vpop.f32.mrf.mxu0
          %v741 = vadd.f32 0.0, %v740
          %v742 = vpop.f32.mrf.mxu0
          %743 = vmatprep.mubr.f32.mxu0 0.0
          %744 = vmatmul.mubr.f32.gmra.mxu0 %v642
          %v745 = vpop.f32.mrf.mxu0
          %v746 = vadd.f32 0.0, %v745
          %v747 = vpop.f32.mrf.mxu0
          %748 = vdwg.mxu0
          %v749 = vadd.f32 %v568, %v711
          %v750 = vadd.f32 %v573, %v716
          %v751 = vadd.f32 %v578, %v721
          %v752 = vadd.f32 %v583, %v726
          %v753 = vadd.f32 %v588, %v731
          %v754 = vadd.f32 %v593, %v736
          %v755 = vadd.f32 %v598, %v741
          %v756 = vadd.f32 %v603, %v746
          %s757 = sadd.s32 %s210, 64
          %s758 = scalar_lea.vmem [#allocation2], %s757
          %v759 = vld [vmem:[%s758] sm:$0xff]
          %v760 = vld [vmem:[%s758 + $0x8] sm:$0xff]
          %v761 = vld [vmem:[%s758 + $0x10] sm:$0xff]
          %v762 = vld [vmem:[%s758 + $0x18] sm:$0xff]
          %v763 = vld [vmem:[%s758 + $0x20] sm:$0xff]
          %v764 = vld [vmem:[%s758 + $0x28] sm:$0xff]
          %v765 = vld [vmem:[%s758 + $0x30] sm:$0xff]
          %v766 = vld [vmem:[%s758 + $0x38] sm:$0xff]
          %s767 = scalar_lea.vmem [#allocation3], 64
          %v768 = vld [vmem:[%s767] sm:$0xff]
          %v769 = vld [vmem:[%s767 + $0x8] sm:$0xff]
          %v770 = vld [vmem:[%s767 + $0x10] sm:$0xff]
          %v771 = vld [vmem:[%s767 + $0x18] sm:$0xff]
          %v773 = vsel %vm445, %v759, 0
          %v776 = vsel %vm445, %v760, 0
          %v779 = vsel %vm445, %v761, 0
          %v782 = vsel %vm445, %v762, 0
          %v785 = vsel %vm445, %v763, 0
          %v788 = vsel %vm445, %v764, 0
          %v791 = vsel %vm445, %v765, 0
          %v794 = vsel %vm445, %v766, 0
          %796 = vmatprep.subr.mxu0 0.0
          %797 = vmatpush1.msra.mxu0 0.0
          %798 = vmatprep.subr.mxu0 0.0
          %799 = vmatpush1.msra.mxu0 0.0
          %800 = vmatprep.subr.mxu0 0.0
          %801 = vmatpush1.msra.mxu0 0.0
          %802 = vmatprep.subr.mxu0 0.0
          %803 = vmatpush1.msra.mxu0 0.0
          %804 = vmatprep.subr.mxu0 0.0
          %805 = vmatpush1.msra.mxu0 0.0
          %806 = vmatprep.subr.mxu0 0.0
          %807 = vmatpush1.msra.mxu0 0.0
          %808 = vmatprep.subr.mxu0 0.0
          %809 = vmatpush1.msra.mxu0 0.0
          %810 = vmatprep.subr.mxu0 0.0
          %811 = vmatpush1.msra.mxu0 0.0
          %812 = vmatprep.subr.mxu0 0.0
          %813 = vmatpush1.msra.mxu0 0.0
          %814 = vmatprep.subr.mxu0 0.0
          %815 = vmatpush1.msra.mxu0 0.0
          %816 = vmatprep.subr.mxu0 0.0
          %817 = vmatpush1.msra.mxu0 0.0
          %818 = vmatprep.subr.mxu0 0.0
          %819 = vmatpush1.msra.mxu0 0.0
          %820 = vmatprep.subr.mxu0 0.0
          %821 = vmatpush1.msra.mxu0 %v771
          %822 = vmatprep.subr.mxu0 0.0
          %823 = vmatpush1.msra.mxu0 %v770
          %824 = vmatprep.subr.mxu0 0.0
          %825 = vmatpush1.msra.mxu0 %v769
          %826 = vmatprep.subr.mxu0 0.0
          %827 = vmatpush1.msra.mxu0 %v768
          %828 = vmatprep.subr.mxu0 0.0
          %829 = vmatpush2.msra.mxu0 0.0
          %830 = vmatprep.subr.mxu0 0.0
          %831 = vmatpush2.msra.mxu0 0.0
          %832 = vmatprep.subr.mxu0 0.0
          %833 = vmatpush2.msra.mxu0 0.0
          %834 = vmatprep.subr.mxu0 0.0
          %835 = vmatpush2.msra.mxu0 0.0
          %836 = vmatprep.subr.mxu0 0.0
          %837 = vmatpush2.msra.mxu0 0.0
          %838 = vmatprep.subr.mxu0 0.0
          %839 = vmatpush2.msra.mxu0 0.0
          %840 = vmatprep.subr.mxu0 0.0
          %841 = vmatpush2.msra.mxu0 0.0
          %842 = vmatprep.subr.mxu0 0.0
          %843 = vmatpush2.msra.mxu0 0.0
          %844 = vmatprep.subr.mxu0 0.0
          %845 = vmatpush2.msra.mxu0 0.0
          %846 = vmatprep.subr.mxu0 0.0
          %847 = vmatpush2.msra.mxu0 0.0
          %848 = vmatprep.subr.mxu0 0.0
          %849 = vmatpush2.msra.mxu0 0.0
          %850 = vmatprep.subr.mxu0 0.0
          %851 = vmatpush2.msra.mxu0 0.0
          %852 = vmatprep.subr.mxu0 0.0
          %853 = vmatpush2.msra.mxu0 0.0
          %854 = vmatprep.subr.mxu0 0.0
          %855 = vmatpush2.msra.mxu0 0.0
          %856 = vmatprep.subr.mxu0 0.0
          %857 = vmatpush2.msra.mxu0 0.0
          %858 = vmatprep.subr.mxu0 0.0
          %859 = vmatpush2.msra.mxu0 0.0
          %860 = vmatprep.mubr.f32.mxu0 0.0
          %861 = vmatmul.mubr.f32.gmra.mxu0 %v773
          %v862 = vpop.f32.mrf.mxu0
          %v863 = vadd.f32 0.0, %v862
          %v864 = vpop.f32.mrf.mxu0
          %865 = vmatprep.mubr.f32.mxu0 0.0
          %866 = vmatmul.mubr.f32.gmra.mxu0 %v776
          %v867 = vpop.f32.mrf.mxu0
          %v868 = vadd.f32 0.0, %v867
          %v869 = vpop.f32.mrf.mxu0
          %870 = vmatprep.mubr.f32.mxu0 0.0
          %871 = vmatmul.mubr.f32.gmra.mxu0 %v779
          %v872 = vpop.f32.mrf.mxu0
          %v873 = vadd.f32 0.0, %v872
          %v874 = vpop.f32.mrf.mxu0
          %875 = vmatprep.mubr.f32.mxu0 0.0
          %876 = vmatmul.mubr.f32.gmra.mxu0 %v782
          %v877 = vpop.f32.mrf.mxu0
          %v878 = vadd.f32 0.0, %v877
          %v879 = vpop.f32.mrf.mxu0
          %880 = vmatprep.mubr.f32.mxu0 0.0
          %881 = vmatmul.mubr.f32.gmra.mxu0 %v785
          %v882 = vpop.f32.mrf.mxu0
          %v883 = vadd.f32 0.0, %v882
          %v884 = vpop.f32.mrf.mxu0
          %885 = vmatprep.mubr.f32.mxu0 0.0
          %886 = vmatmul.mubr.f32.gmra.mxu0 %v788
          %v887 = vpop.f32.mrf.mxu0
          %v888 = vadd.f32 0.0, %v887
          %v889 = vpop.f32.mrf.mxu0
          %890 = vmatprep.mubr.f32.mxu0 0.0
          %891 = vmatmul.mubr.f32.gmra.mxu0 %v791
          %v892 = vpop.f32.mrf.mxu0
          %v893 = vadd.f32 0.0, %v892
          %v894 = vpop.f32.mrf.mxu0
          %895 = vmatprep.mubr.f32.mxu0 0.0
          %896 = vmatmul.mubr.f32.gmra.mxu0 %v794
          %v897 = vpop.f32.mrf.mxu0
          %v898 = vadd.f32 0.0, %v897
          %v899 = vpop.f32.mrf.mxu0
          %900 = vdwg.mxu0
          %v901 = vadd.f32 %v749, %v863
          %v902 = vadd.f32 %v750, %v868
          %v903 = vadd.f32 %v751, %v873
          %v904 = vadd.f32 %v752, %v878
          %v905 = vadd.f32 %v753, %v883
          %v906 = vadd.f32 %v754, %v888
          %v907 = vadd.f32 %v755, %v893
          %v908 = vadd.f32 %v756, %v898
          %s909 = sadd.s32 %s210, 128
          %s910 = scalar_lea.vmem [#allocation2], %s909
          %v911 = vld [vmem:[%s910] sm:$0xff]
          %v912 = vld [vmem:[%s910 + $0x8] sm:$0xff]
          %v913 = vld [vmem:[%s910 + $0x10] sm:$0xff]
          %v914 = vld [vmem:[%s910 + $0x18] sm:$0xff]
          %v915 = vld [vmem:[%s910 + $0x20] sm:$0xff]
          %v916 = vld [vmem:[%s910 + $0x28] sm:$0xff]
          %v917 = vld [vmem:[%s910 + $0x30] sm:$0xff]
          %v918 = vld [vmem:[%s910 + $0x38] sm:$0xff]
          %s919 = scalar_lea.vmem [#allocation3], 96
          %v920 = vld [vmem:[%s919] sm:$0xff]
          %v921 = vld [vmem:[%s919 + $0x8] sm:$0xff]
          %v922 = vld [vmem:[%s919 + $0x10] sm:$0xff]
          %v923 = vld [vmem:[%s919 + $0x18] sm:$0xff]
          %v925 = vsel %vm445, %v911, 0
          %v928 = vsel %vm445, %v912, 0
          %v931 = vsel %vm445, %v913, 0
          %v934 = vsel %vm445, %v914, 0
          %v937 = vsel %vm445, %v915, 0
          %v940 = vsel %vm445, %v916, 0
          %v943 = vsel %vm445, %v917, 0
          %v946 = vsel %vm445, %v918, 0
          %948 = vmatprep.subr.mxu0 0.0
          %949 = vmatpush1.msra.mxu0 0.0
          %950 = vmatprep.subr.mxu0 0.0
          %951 = vmatpush1.msra.mxu0 0.0
          %952 = vmatprep.subr.mxu0 0.0
          %953 = vmatpush1.msra.mxu0 0.0
          %954 = vmatprep.subr.mxu0 0.0
          %955 = vmatpush1.msra.mxu0 0.0
          %956 = vmatprep.subr.mxu0 0.0
          %957 = vmatpush1.msra.mxu0 0.0
          %958 = vmatprep.subr.mxu0 0.0
          %959 = vmatpush1.msra.mxu0 0.0
          %960 = vmatprep.subr.mxu0 0.0
          %961 = vmatpush1.msra.mxu0 0.0
          %962 = vmatprep.subr.mxu0 0.0
          %963 = vmatpush1.msra.mxu0 0.0
          %964 = vmatprep.subr.mxu0 0.0
          %965 = vmatpush1.msra.mxu0 0.0
          %966 = vmatprep.subr.mxu0 0.0
          %967 = vmatpush1.msra.mxu0 0.0
          %968 = vmatprep.subr.mxu0 0.0
          %969 = vmatpush1.msra.mxu0 0.0
          %970 = vmatprep.subr.mxu0 0.0
          %971 = vmatpush1.msra.mxu0 0.0
          %972 = vmatprep.subr.mxu0 0.0
          %973 = vmatpush1.msra.mxu0 %v923
          %974 = vmatprep.subr.mxu0 0.0
          %975 = vmatpush1.msra.mxu0 %v922
          %976 = vmatprep.subr.mxu0 0.0
          %977 = vmatpush1.msra.mxu0 %v921
          %978 = vmatprep.subr.mxu0 0.0
          %979 = vmatpush1.msra.mxu0 %v920
          %980 = vmatprep.subr.mxu0 0.0
          %981 = vmatpush2.msra.mxu0 0.0
          %982 = vmatprep.subr.mxu0 0.0
          %983 = vmatpush2.msra.mxu0 0.0
          %984 = vmatprep.subr.mxu0 0.0
          %985 = vmatpush2.msra.mxu0 0.0
          %986 = vmatprep.subr.mxu0 0.0
          %987 = vmatpush2.msra.mxu0 0.0
          %988 = vmatprep.subr.mxu0 0.0
          %989 = vmatpush2.msra.mxu0 0.0
          %990 = vmatprep.subr.mxu0 0.0
          %991 = vmatpush2.msra.mxu0 0.0
          %992 = vmatprep.subr.mxu0 0.0
          %993 = vmatpush2.msra.mxu0 0.0
          %994 = vmatprep.subr.mxu0 0.0
          %995 = vmatpush2.msra.mxu0 0.0
          %996 = vmatprep.subr.mxu0 0.0
          %997 = vmatpush2.msra.mxu0 0.0
          %998 = vmatprep.subr.mxu0 0.0
          %999 = vmatpush2.msra.mxu0 0.0
          %1000 = vmatprep.subr.mxu0 0.0
          %1001 = vmatpush2.msra.mxu0 0.0
          %1002 = vmatprep.subr.mxu0 0.0
          %1003 = vmatpush2.msra.mxu0 0.0
          %1004 = vmatprep.subr.mxu0 0.0
          %1005 = vmatpush2.msra.mxu0 0.0
          %1006 = vmatprep.subr.mxu0 0.0
          %1007 = vmatpush2.msra.mxu0 0.0
          %1008 = vmatprep.subr.mxu0 0.0
          %1009 = vmatpush2.msra.mxu0 0.0
          %1010 = vmatprep.subr.mxu0 0.0
          %1011 = vmatpush2.msra.mxu0 0.0
          %1012 = vmatprep.mubr.f32.mxu0 0.0
          %1013 = vmatmul.mubr.f32.gmra.mxu0 %v925
          %v1014 = vpop.f32.mrf.mxu0
          %v1015 = vadd.f32 0.0, %v1014
          %v1016 = vpop.f32.mrf.mxu0
          %1017 = vmatprep.mubr.f32.mxu0 0.0
          %1018 = vmatmul.mubr.f32.gmra.mxu0 %v928
          %v1019 = vpop.f32.mrf.mxu0
          %v1020 = vadd.f32 0.0, %v1019
          %v1021 = vpop.f32.mrf.mxu0
          %1022 = vmatprep.mubr.f32.mxu0 0.0
          %1023 = vmatmul.mubr.f32.gmra.mxu0 %v931
          %v1024 = vpop.f32.mrf.mxu0
          %v1025 = vadd.f32 0.0, %v1024
          %v1026 = vpop.f32.mrf.mxu0
          %1027 = vmatprep.mubr.f32.mxu0 0.0
          %1028 = vmatmul.mubr.f32.gmra.mxu0 %v934
          %v1029 = vpop.f32.mrf.mxu0
          %v1030 = vadd.f32 0.0, %v1029
          %v1031 = vpop.f32.mrf.mxu0
          %1032 = vmatprep.mubr.f32.mxu0 0.0
          %1033 = vmatmul.mubr.f32.gmra.mxu0 %v937
          %v1034 = vpop.f32.mrf.mxu0
          %v1035 = vadd.f32 0.0, %v1034
          %v1036 = vpop.f32.mrf.mxu0
          %1037 = vmatprep.mubr.f32.mxu0 0.0
          %1038 = vmatmul.mubr.f32.gmra.mxu0 %v940
          %v1039 = vpop.f32.mrf.mxu0
          %v1040 = vadd.f32 0.0, %v1039
          %v1041 = vpop.f32.mrf.mxu0
          %1042 = vmatprep.mubr.f32.mxu0 0.0
          %1043 = vmatmul.mubr.f32.gmra.mxu0 %v943
          %v1044 = vpop.f32.mrf.mxu0
          %v1045 = vadd.f32 0.0, %v1044
          %v1046 = vpop.f32.mrf.mxu0
          %1047 = vmatprep.mubr.f32.mxu0 0.0
          %1048 = vmatmul.mubr.f32.gmra.mxu0 %v946
          %v1049 = vpop.f32.mrf.mxu0
          %v1050 = vadd.f32 0.0, %v1049
          %v1051 = vpop.f32.mrf.mxu0
          %1052 = vdwg.mxu0
          %v1053 = vadd.f32 %v901, %v1015
          %v1054 = vadd.f32 %v902, %v1020
          %v1055 = vadd.f32 %v903, %v1025
          %v1056 = vadd.f32 %v904, %v1030
          %v1057 = vadd.f32 %v905, %v1035
          %v1058 = vadd.f32 %v906, %v1040
          %v1059 = vadd.f32 %v907, %v1045
          %v1060 = vadd.f32 %v908, %v1050
          %1061 = vst [vmem:[%s206] sm:$0xff] %v1053
          %1062 = vst [vmem:[%s206 + $0x8] sm:$0xff] %v1054
          %1063 = vst [vmem:[%s206 + $0x10] sm:$0xff] %v1055
          %1064 = vst [vmem:[%s206 + $0x18] sm:$0xff] %v1056
          %1065 = vst [vmem:[%s206 + $0x20] sm:$0xff] %v1057
          %1066 = vst [vmem:[%s206 + $0x28] sm:$0xff] %v1058
          %1067 = vst [vmem:[%s206 + $0x30] sm:$0xff] %v1059
          %1068 = vst [vmem:[%s206 + $0x38] sm:$0xff] %v1060
        $region44: #{tpu_custom_call.1} parent=35 // pred_fallthru
          _
        %s1069 = sand.u32 %s127, 1
        %s1070 = scalar_lea.sflag [#allocation5], %s1069
        %s1071 = sand.u32 %s127, 1
        %s1072 = smul.addr %s1071, 64
        %s1073 = scalar_lea.vmem [#allocation6], %s1072
        // Predicated region
        $region45: #{tpu_custom_call.1} parent=35 // pred_check
          %p1074 = pneg %p137
        $region46: #{tpu_custom_call.1} parent=35 // pred_check_branch
          %1076 = sbr.rel (%p1074) target = $region48
        $region47: #{tpu_custom_call.1} parent=35 // pred_region
          %p1077 = scmp.eq.s32.totalorder %s23, 2
          %s1078 = scalar_select %p1077, %s24, 0
          %s1079 = smul.u32 8, %s1078
          %s1081 = ssub.s32 1024, 1024
          %1082 = vsyncadd %s1070, %s1081
          %s1083 = smul.addr %s1079, 128
          %s1084 = scalar_lea.hbm %s4, %s1083
          %s1085 = sshll.u32 %s1073, 4
          %s1086 = int_to_ptr.vmem [resolvable:$true] %s1085
          %1091 = dma.vmem_to_hbm [thread:$0]  %s1086, 1024, %s1084, %s1070, 128, 128, 8
        $region48: #{tpu_custom_call.1} parent=35 // pred_fallthru
          _
      $region36: #{tpu_custom_call.1} parent=5 // pred_fallthru
        _
      %p1092 = scmp.le.s32.totalorder 2, %s14
      // Predicated region
      $region49: #{tpu_custom_call.1} parent=5 // pred_check
        %p1093 = pneg %p1092
      $region50: #{tpu_custom_call.1} parent=5 // pred_check_branch
        %1095 = sbr.rel (%p1093) target = $region52
      $region51: #{tpu_custom_call.1} parent=5 // pred_region
        %s1096 = ssub.s32 %s14, 2
        // Predicated region
        $region53: #{tpu_custom_call.1} parent=51 // pred_check
          %p1097 = pneg %p143
        $region54: #{tpu_custom_call.1} parent=51 // pred_check_branch
          %1099 = sbr.rel (%p1097) target = $region56
        $region55: #{tpu_custom_call.1} parent=51 // pred_region
          %s1100 = sand.u32 %s128, 1
          %s1101 = scalar_lea.sflag [#allocation5], %s1100
          %s1102 = sand.u32 %s128, 1
          %s1103 = smul.addr %s1102, 64
          %s1104 = scalar_lea.vmem [#allocation6], %s1103
          %1105 = dma.done %s1101, 1024
        $region56: #{tpu_custom_call.1} parent=51 // pred_fallthru
          _
      $region52: #{tpu_custom_call.1} parent=5 // pred_fallthru
        _
    $region6: #{tpu_custom_call.1} parent=1 // loop_footer
      %s18 = sadd.s32 1, %s14
    $region7: #{tpu_custom_call.1} parent=1 // loop_footer_branch
      %13 = sbr.rel target = $region3
    $region8: #{tpu_custom_call.1} parent=1 // loop_exit
      _
    %1106 = vsyncpa [#allocation4], 1
    %s1107 = scalar_lea.sflag [#allocation4], 1
    %1108 = vsyncpa %s1107, 1
    %1109 = vsyncpa [#allocation5], 1
    %s1110 = scalar_lea.sflag [#allocation5], 1
    %1111 = vsyncpa %s1110, 1

</llo_original>
